<compile_context>
chip_gen: v5e
topology: v5e:2x2
jax: 0.10.0
libtpu: 0.0.40
codegen_flags: <defaults>
</compile_context>

<pallas_src>
import math
import functools

import jax
import jax.numpy as jnp
from jax.experimental import pallas as pl
from jax.experimental.pallas import tpu as pltpu


def _round_up(n, m):
    return ((n + m - 1) // m) * m


# ------------------------------ Pallas kernel -------------------------------

def fused_mha_kernel(q_ref, k_ref, v_ref, w_ref, b_ref, ctx_ref, attn_ref,
                     *, mxu_dtype):
    """One (batch b, q-row tile qi, head h) grid step.

    q_ref   : (1, TQ, d_model)    raw queries, tile qi of batch b
    k_ref   : (1, SK, d_model)    raw keys of batch b   (resident across qi, h)
    v_ref   : (1, SK, d_model)    raw values of batch b (resident across qi, h)
    w_ref   : (3, 1, d_model, D)  head-h columns of [Wq^T*scale, Wk^T, Wv^T]
    b_ref   : (3, 1, 1, D)        head-h slices of [bq*scale, bk, bv] (f32)
    ctx_ref : (1, TQ, D) or (1, 1, TQ, D)
    attn_ref: (1, 1, TQ, SK)
    """
    xq = q_ref[0].astype(mxu_dtype)
    xk = k_ref[0].astype(mxu_dtype)
    xv = v_ref[0].astype(mxu_dtype)

    def proj(x, i):
        # bf16 (or f32) MXU operands, f32 accumulation, f32 bias add.
        y = jax.lax.dot_general(
            x, w_ref[i, 0].astype(mxu_dtype),
            dimension_numbers=(((1,), (0,)), ((), ())),
            preferred_element_type=jnp.float32)
        return y + b_ref[i, 0]

    qh = proj(xq, 0)          # (TQ, D); 1/sqrt(D) already folded into Wq, bq
    kh = proj(xk, 1)          # (SK, D)
    vh = proj(xv, 2)          # (SK, D)

    # scores = qh @ kh^T via contracting dims (no key transpose copy), f32 acc.
    scores = jax.lax.dot_general(
        qh.astype(mxu_dtype), kh.astype(mxu_dtype),
        dimension_numbers=(((1,), (1,)), ((), ())),
        preferred_element_type=jnp.float32)

    # Numerically-stable softmax in f32; exact reciprocal so the returned
    # attention rows sum to 1.
    m = jnp.max(scores, axis=-1, keepdims=True)
    e = jnp.exp(scores - m)
    p = e * pl.reciprocal(jnp.sum(e, axis=-1, keepdims=True))

    # TODO(synk): dropout on attn skipped (identity / eval mode).
    attn_ref[...] = p.reshape(attn_ref.shape).astype(attn_ref.dtype)

    ctx = jax.lax.dot_general(
        p.astype(mxu_dtype), vh.astype(mxu_dtype),
        dimension_numbers=(((1,), (0,)), ((), ())),
        preferred_element_type=jnp.float32)
    ctx_ref[...] = ctx.reshape(ctx_ref.shape).astype(ctx_ref.dtype)


# ------------------------------ host wrapper --------------------------------

def pallas_fused_mha(q, k, v, w_heads, b_heads, *, n_heads, attn_dim,
                     mxu_dtype=jnp.bfloat16, max_q_tile=512,
                     vmem_limit_bytes=None):
    """q: (B, Sq, d_model); k, v: (B, Sk, d_model) ->
       ctx (B, Sq, H*D), attn (H*B, Sq, Sk)."""
    b, sq, dm = q.shape
    _, sk, _ = k.shape
    h, d = n_heads, attn_dim
    assert max_q_tile % 8 == 0

    # q-row tiling bounds the per-step (TQ, SK) attn / score blocks in VMEM.
    if sq <= max_q_tile:
        tq, sq_pad = sq, sq
    else:
        tq = max_q_tile
        sq_pad = _round_up(sq, tq)
        q = jnp.pad(q, ((0, 0), (0, sq_pad - sq), (0, 0)))

    grid = (b, sq_pad // tq, h)

    # ctx written lane-dense directly into (B, Sq, H*D) when D % 128 == 0;
    # otherwise a (B, H, Sq, D) staging layout keeps every block's last two
    # dims full-extent / (8,128)-aligned, merged with one transpose afterwards.
    direct_ctx = (d % 128 == 0)
    if direct_ctx:
        ctx_shape = jax.ShapeDtypeStruct((b, sq_pad, h * d), q.dtype)
        ctx_spec = pl.BlockSpec((1, tq, d), lambda bi, qi, hi: (bi, qi, hi))
    else:
        ctx_shape = jax.ShapeDtypeStruct((b, h, sq_pad, d), q.dtype)
        ctx_spec = pl.BlockSpec((1, 1, tq, d), lambda bi, qi, hi: (bi, hi, qi, 0))

    attn_shape = jax.ShapeDtypeStruct((h, b, sq_pad, sk), q.dtype)
    attn_spec = pl.BlockSpec((1, 1, tq, sk), lambda bi, qi, hi: (hi, bi, qi, 0))

    cp_kwargs = dict(dimension_semantics=("parallel", "parallel", "parallel"))
    if vmem_limit_bytes is not None:
        cp_kwargs["vmem_limit_bytes"] = vmem_limit_bytes

    kern = functools.partial(fused_mha_kernel, mxu_dtype=mxu_dtype)

    ctx, attn = pl.pallas_call(
        kern,
        out_shape=(ctx_shape, attn_shape),
        grid_spec=pltpu.PrefetchScalarGridSpec(
            num_scalar_prefetch=0,
            grid=grid,
            in_specs=[
                pl.BlockSpec((1, tq, dm), lambda bi, qi, hi: (bi, qi, 0)),
                pl.BlockSpec((1, sk, dm), lambda bi, qi, hi: (bi, 0, 0)),  # resident
                pl.BlockSpec((1, sk, dm), lambda bi, qi, hi: (bi, 0, 0)),  # resident
                pl.BlockSpec((3, 1, dm, d), lambda bi, qi, hi: (0, hi, 0, 0)),
                pl.BlockSpec((3, 1, 1, d), lambda bi, qi, hi: (0, hi, 0, 0)),
            ],
            out_specs=[ctx_spec, attn_spec],
        ),
        compiler_params=pltpu.CompilerParams(**cp_kwargs),
    )(q, k, v, w_heads, b_heads)

    if direct_ctx:
        ctx = ctx[:, :sq, :]
    else:
        ctx = jnp.transpose(ctx[:, :, :sq, :], (0, 2, 1, 3)).reshape(b, sq, h * d)
    attn = attn[:, :, :sq, :].reshape(h * b, sq, sk)
    return ctx, attn


class MultiHeadAttentionPallas:
    def __init__(self, d_model=32, n_heads=4, key=None,
                 mxu_dtype=jnp.bfloat16, max_q_tile=512, vmem_limit_bytes=None):
        assert d_model % n_heads == 0
        self.d_model = d_model
        self.n_heads = n_heads
        self.attn_dim = d_model // n_heads
        self.mxu_dtype = mxu_dtype
        self.max_q_tile = max_q_tile
        self.vmem_limit_bytes = vmem_limit_bytes

        if key is None:
            key = jax.random.PRNGKey(0)
        kq, kk, kv, bq, bk, bv = jax.random.split(key, 6)
        s = 1.0 / math.sqrt(d_model)
        # PyTorch nn.Linear weight layout: (out_features, in_features)
        self.Wq = jax.random.normal(kq, (d_model, d_model), jnp.float32) * s
        self.Wk = jax.random.normal(kk, (d_model, d_model), jnp.float32) * s
        self.Wv = jax.random.normal(kv, (d_model, d_model), jnp.float32) * s
        self.bq = jax.random.normal(bq, (d_model,), jnp.float32) * s
        self.bk = jax.random.normal(bk, (d_model,), jnp.float32) * s
        self.bv = jax.random.normal(bv, (d_model,), jnp.float32) * s

        # Kernel-side parameters prepared once at init:
        #  * transposed to (in, out) so the kernel does a straight dot,
        #  * 1/sqrt(attn_dim) folded into Wq/bq (no runtime score scaling),
        #  * reshaped to per-head column blocks (3, H, d_model, D) so the head
        #    split is pure BlockSpec indexing (no in-kernel lane slicing),
        #  * weights stored in the MXU operand dtype (bf16 by default) to halve
        #    their DMA bytes; biases stay f32 (added to the f32 accumulator).
        scale = 1.0 / math.sqrt(self.attn_dim)
        w_all = jnp.stack([self.Wq.T * scale, self.Wk.T, self.Wv.T])   # (3, dm, dm)
        self.w_heads = (w_all.reshape(3, d_model, n_heads, self.attn_dim)
                        .transpose(0, 2, 1, 3)
                        .astype(mxu_dtype))                             # (3, H, dm, D)
        b_all = jnp.stack([self.bq * scale, self.bk, self.bv])          # (3, dm)
        self.b_heads = b_all.reshape(3, n_heads, 1, self.attn_dim)      # (3, H, 1, D) f32

    def __call__(self, q, k, v, mask=None):
        assert mask is None  # TODO(synk): optional mask path not implemented
        return pallas_fused_mha(
            q, k, v, self.w_heads, self.b_heads,
            n_heads=self.n_heads, attn_dim=self.attn_dim,
            mxu_dtype=self.mxu_dtype, max_q_tile=self.max_q_tile,
            vmem_limit_bytes=self.vmem_limit_bytes)


# ------------------------------- reference ----------------------------------

def _reference(mha, q, k, v):
    """Plain-JAX (full f32) reference mirroring the PyTorch module."""
    b, sq, dm = q.shape
    _, sk, _ = k.shape
    h, d = mha.n_heads, mha.attn_dim

    def lin(x, w, bi):
        return x @ w.T + bi

    def split(x, s):
        x = x.reshape(b, s, h, d)
        return jnp.transpose(x, (2, 0, 1, 3)).reshape(h * b, s, d)

    qh = split(lin(q, mha.Wq, mha.bq), sq)
    kh = split(lin(k, mha.Wk, mha.bk), sk)
    vh = split(lin(v, mha.Wv, mha.bv), sk)
    scores = jnp.einsum("bqd,bkd->bqk", qh, kh) / math.sqrt(d)
    attn = jax.nn.softmax(scores, axis=-1)
    ctx = jnp.einsum("bqk,bkd->bqd", attn, vh)
    ctx = ctx.reshape(h, b, sq, d)
    ctx = jnp.transpose(ctx, (1, 2, 0, 3)).reshape(b, sq, h * d)
    return ctx, attn


# ---------------------------------- main -------------------------------------

if __name__ == "__main__":
    key = jax.random.PRNGKey(0)
    kq, kk_, kv, kp = jax.random.split(key, 4)

    batch, seq, d_model, n_heads = 2, 8, 32, 4
    q = jax.random.normal(kq, (batch, seq, d_model), jnp.float32)
    k = jax.random.normal(kk_, (batch, seq, d_model), jnp.float32)
    v = jax.random.normal(kv, (batch, seq, d_model), jnp.float32)

    mha = MultiHeadAttentionPallas(d_model=d_model, n_heads=n_heads, key=kp)

    ctx, attn = mha(q, k, v)
    jax.block_until_ready(ctx)
    jax.block_until_ready(attn)

    # Sanity check against the full-f32 reference; tolerance covers bf16 MXU
    # operands (f32 accumulation) in the Pallas path.
    ctx_ref, attn_ref = _reference(mha, q, k, v)
    assert ctx.shape == (batch, seq, d_model)
    assert attn.shape == (n_heads * batch, seq, seq)
    assert jnp.allclose(ctx, ctx_ref, atol=5e-2, rtol=5e-2)
    assert jnp.allclose(attn, attn_ref, atol=5e-2, rtol=5e-2)
    # exact softmax reciprocal -> returned attention rows sum to 1
    assert jnp.allclose(jnp.sum(attn, axis=-1), 1.0, atol=1e-3)

    print("KERNEL_OK")
</pallas_src>

<mosaic_0001>
module attributes {stable_mosaic.version = 11 : i64} {
  func.func @fused_mha_kernel(%arg0: i32, %arg1: i32, %arg2: i32, %arg3: memref<1x8x32xf32, #tpu.memory_space<vmem>>, %arg4: memref<1x8x32xf32, #tpu.memory_space<vmem>>, %arg5: memref<1x8x32xf32, #tpu.memory_space<vmem>>, %arg6: memref<3x1x32x8xbf16, #tpu.memory_space<vmem>>, %arg7: memref<3x1x1x8xf32, #tpu.memory_space<vmem>>, %arg8: memref<1x1x8x8xf32, #tpu.memory_space<vmem>>, %arg9: memref<1x1x8x8xf32, #tpu.memory_space<vmem>>) attributes {dimension_semantics = [#tpu.dimension_semantics<parallel>, #tpu.dimension_semantics<parallel>, #tpu.dimension_semantics<parallel>], iteration_bounds = array<i64: 2, 1, 4>, scalar_prefetch = 0 : i64, scratch_operands = 0 : i64, tpu.core_type = #tpu.core_type<tc>, window_params = [{transform_indices = @transform_0, window_bounds = array<i64: 1, 8, 32>}, {transform_indices = @transform_1, window_bounds = array<i64: 1, 8, 32>}, {transform_indices = @transform_2, window_bounds = array<i64: 1, 8, 32>}, {transform_indices = @transform_3, window_bounds = array<i64: 3, 1, 32, 8>}, {transform_indices = @transform_4, window_bounds = array<i64: 3, 1, 1, 8>}, {transform_indices = @transform_5, window_bounds = array<i64: 1, 1, 8, 8>}, {transform_indices = @transform_6, window_bounds = array<i64: 1, 1, 8, 8>}]} {
    %c0 = arith.constant 0 : index
    %c0_0 = arith.constant 0 : index
    %c0_1 = arith.constant 0 : index
    %0 = vector.load %arg3[%c0, %c0_0, %c0_1] : memref<1x8x32xf32, #tpu.memory_space<vmem>>, vector<1x8x32xf32>
    %1 = vector.shape_cast %0 : vector<1x8x32xf32> to vector<8x32xf32>
    %2 = arith.truncf %1 : vector<8x32xf32> to vector<8x32xbf16>
    %c0_2 = arith.constant 0 : index
    %c0_3 = arith.constant 0 : index
    %c0_4 = arith.constant 0 : index
    %3 = vector.load %arg4[%c0_2, %c0_3, %c0_4] : memref<1x8x32xf32, #tpu.memory_space<vmem>>, vector<1x8x32xf32>
    %4 = vector.shape_cast %3 : vector<1x8x32xf32> to vector<8x32xf32>
    %5 = arith.truncf %4 : vector<8x32xf32> to vector<8x32xbf16>
    %c0_5 = arith.constant 0 : index
    %c0_6 = arith.constant 0 : index
    %c0_7 = arith.constant 0 : index
    %6 = vector.load %arg5[%c0_5, %c0_6, %c0_7] : memref<1x8x32xf32, #tpu.memory_space<vmem>>, vector<1x8x32xf32>
    %7 = vector.shape_cast %6 : vector<1x8x32xf32> to vector<8x32xf32>
    %8 = arith.truncf %7 : vector<8x32xf32> to vector<8x32xbf16>
    %c0_8 = arith.constant 0 : index
    %c0_9 = arith.constant 0 : index
    %c0_10 = arith.constant 0 : index
    %c0_11 = arith.constant 0 : index
    %9 = vector.load %arg6[%c0_8, %c0_9, %c0_10, %c0_11] : memref<3x1x32x8xbf16, #tpu.memory_space<vmem>>, vector<1x1x32x8xbf16>
    %10 = vector.shape_cast %9 : vector<1x1x32x8xbf16> to vector<32x8xbf16>
    %cst = arith.constant dense<0.000000e+00> : vector<8x8xf32>
    %11 = tpu.matmul %2, %10, %cst {dimension_numbers = #tpu.dot_dimension_numbers<[1], [0], [0], [1], [0, 0, 1, 1], [], []>} : vector<8x32xbf16>, vector<32x8xbf16>, vector<8x8xf32> -> vector<8x8xf32>
    %c0_12 = arith.constant 0 : index
    %c0_13 = arith.constant 0 : index
    %c0_14 = arith.constant 0 : index
    %c0_15 = arith.constant 0 : index
    %12 = vector.load %arg7[%c0_12, %c0_13, %c0_14, %c0_15] : memref<3x1x1x8xf32, #tpu.memory_space<vmem>>, vector<1x1x1x8xf32>
    %13 = vector.shape_cast %12 : vector<1x1x1x8xf32> to vector<1x8xf32>
    %14 = vector.broadcast %13 : vector<1x8xf32> to vector<8x8xf32>
    %15 = arith.addf %11, %14 : vector<8x8xf32>
    %c1 = arith.constant 1 : index
    %c0_16 = arith.constant 0 : index
    %c0_17 = arith.constant 0 : index
    %c0_18 = arith.constant 0 : index
    %16 = vector.load %arg6[%c1, %c0_16, %c0_17, %c0_18] : memref<3x1x32x8xbf16, #tpu.memory_space<vmem>>, vector<1x1x32x8xbf16>
    %17 = vector.shape_cast %16 : vector<1x1x32x8xbf16> to vector<32x8xbf16>
    %cst_19 = arith.constant dense<0.000000e+00> : vector<8x8xf32>
    %18 = tpu.matmul %5, %17, %cst_19 {dimension_numbers = #tpu.dot_dimension_numbers<[1], [0], [0], [1], [0, 0, 1, 1], [], []>} : vector<8x32xbf16>, vector<32x8xbf16>, vector<8x8xf32> -> vector<8x8xf32>
    %c1_20 = arith.constant 1 : index
    %c0_21 = arith.constant 0 : index
    %c0_22 = arith.constant 0 : index
    %c0_23 = arith.constant 0 : index
    %19 = vector.load %arg7[%c1_20, %c0_21, %c0_22, %c0_23] : memref<3x1x1x8xf32, #tpu.memory_space<vmem>>, vector<1x1x1x8xf32>
    %20 = vector.shape_cast %19 : vector<1x1x1x8xf32> to vector<1x8xf32>
    %21 = vector.broadcast %20 : vector<1x8xf32> to vector<8x8xf32>
    %22 = arith.addf %18, %21 : vector<8x8xf32>
    %c2 = arith.constant 2 : index
    %c0_24 = arith.constant 0 : index
    %c0_25 = arith.constant 0 : index
    %c0_26 = arith.constant 0 : index
    %23 = vector.load %arg6[%c2, %c0_24, %c0_25, %c0_26] : memref<3x1x32x8xbf16, #tpu.memory_space<vmem>>, vector<1x1x32x8xbf16>
    %24 = vector.shape_cast %23 : vector<1x1x32x8xbf16> to vector<32x8xbf16>
    %cst_27 = arith.constant dense<0.000000e+00> : vector<8x8xf32>
    %25 = tpu.matmul %8, %24, %cst_27 {dimension_numbers = #tpu.dot_dimension_numbers<[1], [0], [0], [1], [0, 0, 1, 1], [], []>} : vector<8x32xbf16>, vector<32x8xbf16>, vector<8x8xf32> -> vector<8x8xf32>
    %c2_28 = arith.constant 2 : index
    %c0_29 = arith.constant 0 : index
    %c0_30 = arith.constant 0 : index
    %c0_31 = arith.constant 0 : index
    %26 = vector.load %arg7[%c2_28, %c0_29, %c0_30, %c0_31] : memref<3x1x1x8xf32, #tpu.memory_space<vmem>>, vector<1x1x1x8xf32>
    %27 = vector.shape_cast %26 : vector<1x1x1x8xf32> to vector<1x8xf32>
    %28 = vector.broadcast %27 : vector<1x8xf32> to vector<8x8xf32>
    %29 = arith.addf %25, %28 : vector<8x8xf32>
    %30 = arith.truncf %15 : vector<8x8xf32> to vector<8x8xbf16>
    %31 = arith.truncf %22 : vector<8x8xf32> to vector<8x8xbf16>
    %cst_32 = arith.constant dense<0.000000e+00> : vector<8x8xf32>
    %32 = tpu.matmul %30, %31, %cst_32 {dimension_numbers = #tpu.dot_dimension_numbers<[1], [1], [0], [0], [0, 0, 1, 0], [], []>} : vector<8x8xbf16>, vector<8x8xbf16>, vector<8x8xf32> -> vector<8x8xf32>
    %cst_33 = arith.constant dense<0xFF800000> : vector<8xf32>
    %33 = vector.multi_reduction <maximumf>, %32, %cst_33 [1] : vector<8x8xf32> to vector<8xf32>
    %34 = vector.shape_cast %33 : vector<8xf32> to vector<8x1xf32>
    %35 = vector.broadcast %34 : vector<8x1xf32> to vector<8x8xf32>
    %36 = arith.subf %32, %35 : vector<8x8xf32>
    %37 = math.exp %36 : vector<8x8xf32>
    %cst_34 = arith.constant dense<0.000000e+00> : vector<8xf32>
    %38 = vector.multi_reduction <add>, %37, %cst_34 [1] : vector<8x8xf32> to vector<8xf32>
    %39 = vector.shape_cast %38 : vector<8xf32> to vector<8x1xf32>
    %40 = tpu.reciprocal %39 : vector<8x1xf32> -> vector<8x1xf32>
    %41 = vector.broadcast %40 : vector<8x1xf32> to vector<8x8xf32>
    %42 = arith.mulf %37, %41 : vector<8x8xf32>
    %43 = vector.shape_cast %42 : vector<8x8xf32> to vector<1x1x8x8xf32>
    %c0_35 = arith.constant 0 : index
    %c0_36 = arith.constant 0 : index
    %c0_37 = arith.constant 0 : index
    %c0_38 = arith.constant 0 : index
    %44 = vector.load %arg9[%c0_35, %c0_36, %c0_37, %c0_38] : memref<1x1x8x8xf32, #tpu.memory_space<vmem>>, vector<1x1x8x8xf32>
    tpu.vector_store %arg9[%c0_35, %c0_36, %c0_37, %c0_38], %43 {strides = array<i32>} : memref<1x1x8x8xf32, #tpu.memory_space<vmem>>, vector<1x1x8x8xf32>,
    %45 = arith.truncf %42 : vector<8x8xf32> to vector<8x8xbf16>
    %46 = arith.truncf %29 : vector<8x8xf32> to vector<8x8xbf16>
    %cst_39 = arith.constant dense<0.000000e+00> : vector<8x8xf32>
    %47 = tpu.matmul %45, %46, %cst_39 {dimension_numbers = #tpu.dot_dimension_numbers<[1], [0], [0], [1], [0, 0, 1, 1], [], []>} : vector<8x8xbf16>, vector<8x8xbf16>, vector<8x8xf32> -> vector<8x8xf32>
    %48 = vector.shape_cast %47 : vector<8x8xf32> to vector<1x1x8x8xf32>
    %c0_40 = arith.constant 0 : index
    %c0_41 = arith.constant 0 : index
    %c0_42 = arith.constant 0 : index
    %c0_43 = arith.constant 0 : index
    %49 = vector.load %arg8[%c0_40, %c0_41, %c0_42, %c0_43] : memref<1x1x8x8xf32, #tpu.memory_space<vmem>>, vector<1x1x8x8xf32>
    tpu.vector_store %arg8[%c0_40, %c0_41, %c0_42, %c0_43], %48 {strides = array<i32>} : memref<1x1x8x8xf32, #tpu.memory_space<vmem>>, vector<1x1x8x8xf32>,
    return
  }
  func.func @transform_0(%arg0: i32, %arg1: i32, %arg2: i32) -> (i32, i32, i32) {
    %c0_i32 = arith.constant 0 : i32
    %c0_i32_0 = arith.constant 0 : i32
    return %arg0, %arg1, %c0_i32 : i32, i32, i32
  }
  func.func @transform_1(%arg0: i32, %arg1: i32, %arg2: i32) -> (i32, i32, i32) {
    %c0_i32 = arith.constant 0 : i32
    %c0_i32_0 = arith.constant 0 : i32
    %c0_i32_1 = arith.constant 0 : i32
    return %arg0, %c0_i32, %c0_i32_0 : i32, i32, i32
  }
  func.func @transform_2(%arg0: i32, %arg1: i32, %arg2: i32) -> (i32, i32, i32) {
    %c0_i32 = arith.constant 0 : i32
    %c0_i32_0 = arith.constant 0 : i32
    %c0_i32_1 = arith.constant 0 : i32
    return %arg0, %c0_i32, %c0_i32_0 : i32, i32, i32
  }
  func.func @transform_3(%arg0: i32, %arg1: i32, %arg2: i32) -> (i32, i32, i32, i32) {
    %c0_i32 = arith.constant 0 : i32
    %c0_i32_0 = arith.constant 0 : i32
    %c0_i32_1 = arith.constant 0 : i32
    %c0_i32_2 = arith.constant 0 : i32
    return %c0_i32, %arg2, %c0_i32_0, %c0_i32_1 : i32, i32, i32, i32
  }
  func.func @transform_4(%arg0: i32, %arg1: i32, %arg2: i32) -> (i32, i32, i32, i32) {
    %c0_i32 = arith.constant 0 : i32
    %c0_i32_0 = arith.constant 0 : i32
    %c0_i32_1 = arith.constant 0 : i32
    %c0_i32_2 = arith.constant 0 : i32
    return %c0_i32, %arg2, %c0_i32_0, %c0_i32_1 : i32, i32, i32, i32
  }
  func.func @transform_5(%arg0: i32, %arg1: i32, %arg2: i32) -> (i32, i32, i32, i32) {
    %c0_i32 = arith.constant 0 : i32
    %c0_i32_0 = arith.constant 0 : i32
    return %arg0, %arg2, %arg1, %c0_i32 : i32, i32, i32, i32
  }
  func.func @transform_6(%arg0: i32, %arg1: i32, %arg2: i32) -> (i32, i32, i32, i32) {
    %c0_i32 = arith.constant 0 : i32
    %c0_i32_0 = arith.constant 0 : i32
    return %arg2, %arg0, %arg1, %c0_i32 : i32, i32, i32, i32
  }
}

</mosaic_0001>

<llo_original>
// kernel: tpu_custom_call.1
$region0: #{tpu_custom_call.1}
  #allocation0 [shape = 'u32[]', space=smem, size = 0x4, offset = 0x4, fixed_abs, tag = 'smem constant byte address 0x4 - core index']
  #allocation1 [shape = 'u32[72,128]{1,0:T(1,128)}', space=vmem, size = 0x9000, scoped, tag = 'internal scratch']
  %s0 = inlined_call_operand.vmem [shape: f32[2,8,32], index: 0, kind: input, shape index: {}]
  %s1 = inlined_call_operand.vmem [shape: f32[2,8,32], index: 1, kind: input, shape index: {}]
  %s2 = inlined_call_operand.vmem [shape: f32[2,8,32], index: 2, kind: input, shape index: {}]
  %s3 = inlined_call_operand.vmem [shape: bf16[3,4,32,8], index: 3, kind: input, shape index: {}]
  %s4 = inlined_call_operand.vmem [shape: f32[3,4,1,8], index: 4, kind: input, shape index: {}]
  %s5 = inlined_call_operand.hbm [shape: f32[2,4,8,8], index: 5, kind: output, shape index: {0}]
  %s6 = inlined_call_operand.hbm [shape: f32[4,2,8,8], index: 6, kind: output, shape index: {1}]
  %7 = xla_tuple %s5, %s6
  %s8 = sld [smem:[#allocation0]]
  $region136: #{tpu_custom_call.1} parent=0
    _
  %s10 = ssub.s32 1, %s8
  %s11 = scalar_select 0, %s10, %s8
  $region1: #{tpu_custom_call.1} parent=0
    #allocation2 [shape = 'u8[49152]{0}', space=vmem, size = 0xc000, scoped, tag = 'input window, operand 3']
    #allocation3 [shape = 'u8[3072]{0}', space=vmem, size = 0xc00, scoped, tag = 'input window, operand 4']
    #allocation4 [shape = 'u8[8192]{0}', space=vmem, size = 0x2000, scoped, tag = 'output window, operand 0']
    #allocation5 [shape = 's32[2]{0}', space=sflag, size = 0x8, scoped, tag = 'scoped memory for tpu_custom_call.1']
    #allocation6 [shape = 'u8[8192]{0}', space=vmem, size = 0x2000, scoped, tag = 'output window, operand 1']
    #allocation7 [shape = 's32[2]{0}', space=sflag, size = 0x8, scoped, tag = 'scoped memory for tpu_custom_call.1']
    %12 = vsyncpa [#allocation5], 0
    %s13 = scalar_lea.sflag [#allocation5], 1
    %14 = vsyncpa %s13, 0
    %15 = vsyncpa [#allocation7], 0
    %s16 = scalar_lea.sflag [#allocation7], 1
    %17 = vsyncpa %s16, 0
    loop: start=0, step=1, limit=10
    $region2: #{tpu_custom_call.1} parent=1 // loop_pre_header
      _
    $region3: #{tpu_custom_call.1} parent=1 // loop_header
      %s19 = sphi 0, %s23
      %p20 = scmp.ge.s32.totalorder %s19, 10
      %s26 = sphi 0, %s45
      %s27 = sphi 0, %s41
      %s28 = sphi 0, %s37
      %s29 = sphi 0, %s26
      %s30 = sphi 0, %s27
      %s31 = sphi 0, %s28
      %s32 = sphi 0, %s29
      %s33 = sphi 0, %s30
      %s34 = sphi 0, %s31
      %s50 = sphi 0, %s52
      %s53 = sphi 0, %s50
      %s54 = sphi 0, %s53
      %s70 = sphi 0, %s54
      %s76 = sphi 0, %s78
      %s79 = sphi 0, %s76
      %s80 = sphi 0, %s79
      %s96 = sphi 0, %s80
      %s102 = sphi 0, %s104
      %s105 = sphi 0, %s102
      %s106 = sphi 0, %s105
      %s122 = sphi 0, %s106
      %s128 = sphi 0, %s130
      %s131 = sphi 0, %s128
      %s132 = sphi 0, %s131
      %s148 = sphi 0, %s132
      %s154 = sphi 0, %s156
      %s157 = sphi 0, %s154
      %s158 = sphi 0, %s157
      %s174 = sphi 0, %s158
      %s184 = sphi 0, %s186
      %s187 = sphi 0, %s184
      %s188 = sphi 0, %s187
      %s204 = sphi 0, %s188
      %s214 = sphi 0, %s216
      %s217 = sphi 0, %s214
      %s218 = sphi 0, %s217
      %s234 = sphi 0, %s218
    $region4: #{tpu_custom_call.1} parent=1 // loop_header_branch
      %22 = sbr.rel (%p20) target = $region8
    $region5: #{tpu_custom_call.1} parent=1 // loop_body
      %s24 = ssub.s32 %s19, 1
      %s25 = ssub.s32 %s19, 2
      %s35 = sadd.s32 1, %s28
      %p36 = scmp.ge.s32.totalorder %s35, 4
      %s37 = scalar_select %p36, 0, %s35
      %s38 = sadd.s32 1, %s27
      %s39 = scalar_select %p36, %s38, %s27
      %p40 = scmp.ge.s32.totalorder %s39, 1
      %s41 = scalar_select %p40, 0, %s39
      %s42 = sadd.s32 1, %s26
      %s43 = scalar_select %p40, %s42, %s26
      %p44 = scmp.ge.s32.totalorder %s43, 2
      %s45 = scalar_select %p44, 0, %s43
      %s46 = ssub.s32 %s26, %s45
      %s47 = ssub.s32 %s27, %s41
      %s48 = sor.u32 %s46, %s47
      %p49 = scmp.eq.s32.totalorder %s48, 0
      %s51 = sadd.s32 %s50, 1
      %s52 = scalar_select %p49, %s50, %s51
      %p55 = pneg %p49
      %p56 = scmp.eq.s32.totalorder %s19, 7
      %p57 = por %p55, %p56
      %p58 = scmp.ne.s32.totalorder %s50, %s53
      %p59 = scmp.eq.s32.totalorder %s19, 0
      %p60 = por %p58, %p59
      %p61 = scmp.ne.s32.totalorder %s50, %s53
      %p62 = scmp.eq.s32.totalorder %s24, 7
      %p63 = por %p61, %p62
      %p64 = scmp.ne.s32.totalorder %s53, %s54
      %p65 = scmp.eq.s32.totalorder %s24, 0
      %p66 = por %p64, %p65
      %p67 = scmp.ne.s32.totalorder %s53, %s54
      %p68 = scmp.eq.s32.totalorder %s25, 7
      %p69 = por %p67, %p68
      %p71 = scmp.ne.s32.totalorder %s54, %s70
      %p72 = scmp.eq.s32.totalorder %s25, 0
      %p73 = por %p71, %p72
      %s74 = ssub.s32 %s26, %s45
      %p75 = scmp.eq.s32.totalorder %s74, 0
      %s77 = sadd.s32 %s76, 1
      %s78 = scalar_select %p75, %s76, %s77
      %p81 = pneg %p75
      %p82 = scmp.eq.s32.totalorder %s19, 7
      %p83 = por %p81, %p82
      %p84 = scmp.ne.s32.totalorder %s76, %s79
      %p85 = scmp.eq.s32.totalorder %s19, 0
      %p86 = por %p84, %p85
      %p87 = scmp.ne.s32.totalorder %s76, %s79
      %p88 = scmp.eq.s32.totalorder %s24, 7
      %p89 = por %p87, %p88
      %p90 = scmp.ne.s32.totalorder %s79, %s80
      %p91 = scmp.eq.s32.totalorder %s24, 0
      %p92 = por %p90, %p91
      %p93 = scmp.ne.s32.totalorder %s79, %s80
      %p94 = scmp.eq.s32.totalorder %s25, 7
      %p95 = por %p93, %p94
      %p97 = scmp.ne.s32.totalorder %s80, %s96
      %p98 = scmp.eq.s32.totalorder %s25, 0
      %p99 = por %p97, %p98
      %s100 = ssub.s32 %s26, %s45
      %p101 = scmp.eq.s32.totalorder %s100, 0
      %s103 = sadd.s32 %s102, 1
      %s104 = scalar_select %p101, %s102, %s103
      %p107 = pneg %p101
      %p108 = scmp.eq.s32.totalorder %s19, 7
      %p109 = por %p107, %p108
      %p110 = scmp.ne.s32.totalorder %s102, %s105
      %p111 = scmp.eq.s32.totalorder %s19, 0
      %p112 = por %p110, %p111
      %p113 = scmp.ne.s32.totalorder %s102, %s105
      %p114 = scmp.eq.s32.totalorder %s24, 7
      %p115 = por %p113, %p114
      %p116 = scmp.ne.s32.totalorder %s105, %s106
      %p117 = scmp.eq.s32.totalorder %s24, 0
      %p118 = por %p116, %p117
      %p119 = scmp.ne.s32.totalorder %s105, %s106
      %p120 = scmp.eq.s32.totalorder %s25, 7
      %p121 = por %p119, %p120
      %p123 = scmp.ne.s32.totalorder %s106, %s122
      %p124 = scmp.eq.s32.totalorder %s25, 0
      %p125 = por %p123, %p124
      %s126 = ssub.s32 %s28, %s37
      %p127 = scmp.eq.s32.totalorder %s126, 0
      %s129 = sadd.s32 %s128, 1
      %s130 = scalar_select %p127, %s128, %s129
      %p133 = pneg %p127
      %p134 = scmp.eq.s32.totalorder %s19, 7
      %p135 = por %p133, %p134
      %p136 = scmp.ne.s32.totalorder %s128, %s131
      %p137 = scmp.eq.s32.totalorder %s19, 0
      %p138 = por %p136, %p137
      %p139 = scmp.ne.s32.totalorder %s128, %s131
      %p140 = scmp.eq.s32.totalorder %s24, 7
      %p141 = por %p139, %p140
      %p142 = scmp.ne.s32.totalorder %s131, %s132
      %p143 = scmp.eq.s32.totalorder %s24, 0
      %p144 = por %p142, %p143
      %p145 = scmp.ne.s32.totalorder %s131, %s132
      %p146 = scmp.eq.s32.totalorder %s25, 7
      %p147 = por %p145, %p146
      %p149 = scmp.ne.s32.totalorder %s132, %s148
      %p150 = scmp.eq.s32.totalorder %s25, 0
      %p151 = por %p149, %p150
      %s152 = ssub.s32 %s28, %s37
      %p153 = scmp.eq.s32.totalorder %s152, 0
      %s155 = sadd.s32 %s154, 1
      %s156 = scalar_select %p153, %s154, %s155
      %p159 = pneg %p153
      %p160 = scmp.eq.s32.totalorder %s19, 7
      %p161 = por %p159, %p160
      %p162 = scmp.ne.s32.totalorder %s154, %s157
      %p163 = scmp.eq.s32.totalorder %s19, 0
      %p164 = por %p162, %p163
      %p165 = scmp.ne.s32.totalorder %s154, %s157
      %p166 = scmp.eq.s32.totalorder %s24, 7
      %p167 = por %p165, %p166
      %p168 = scmp.ne.s32.totalorder %s157, %s158
      %p169 = scmp.eq.s32.totalorder %s24, 0
      %p170 = por %p168, %p169
      %p171 = scmp.ne.s32.totalorder %s157, %s158
      %p172 = scmp.eq.s32.totalorder %s25, 7
      %p173 = por %p171, %p172
      %p175 = scmp.ne.s32.totalorder %s158, %s174
      %p176 = scmp.eq.s32.totalorder %s25, 0
      %p177 = por %p175, %p176
      %s178 = ssub.s32 %s26, %s45
      %s179 = ssub.s32 %s28, %s37
      %s180 = sor.u32 %s178, %s179
      %s181 = ssub.s32 %s27, %s41
      %s182 = sor.u32 %s180, %s181
      %p183 = scmp.eq.s32.totalorder %s182, 0
      %s185 = sadd.s32 %s184, 1
      %s186 = scalar_select %p183, %s184, %s185
      %p189 = pneg %p183
      %p190 = scmp.eq.s32.totalorder %s19, 7
      %p191 = por %p189, %p190
      %p192 = scmp.ne.s32.totalorder %s184, %s187
      %p193 = scmp.eq.s32.totalorder %s19, 0
      %p194 = por %p192, %p193
      %p195 = scmp.ne.s32.totalorder %s184, %s187
      %p196 = scmp.eq.s32.totalorder %s24, 7
      %p197 = por %p195, %p196
      %p198 = scmp.ne.s32.totalorder %s187, %s188
      %p199 = scmp.eq.s32.totalorder %s24, 0
      %p200 = por %p198, %p199
      %p201 = scmp.ne.s32.totalorder %s187, %s188
      %p202 = scmp.eq.s32.totalorder %s25, 7
      %p203 = por %p201, %p202
      %p205 = scmp.ne.s32.totalorder %s188, %s204
      %p206 = scmp.eq.s32.totalorder %s25, 0
      %p207 = por %p205, %p206
      %s208 = ssub.s32 %s28, %s37
      %s209 = ssub.s32 %s26, %s45
      %s210 = sor.u32 %s208, %s209
      %s211 = ssub.s32 %s27, %s41
      %s212 = sor.u32 %s210, %s211
      %p213 = scmp.eq.s32.totalorder %s212, 0
      %s215 = sadd.s32 %s214, 1
      %s216 = scalar_select %p213, %s214, %s215
      %p219 = pneg %p213
      %p220 = scmp.eq.s32.totalorder %s19, 7
      %p221 = por %p219, %p220
      %p222 = scmp.ne.s32.totalorder %s214, %s217
      %p223 = scmp.eq.s32.totalorder %s19, 0
      %p224 = por %p222, %p223
      %p225 = scmp.ne.s32.totalorder %s214, %s217
      %p226 = scmp.eq.s32.totalorder %s24, 7
      %p227 = por %p225, %p226
      %p228 = scmp.ne.s32.totalorder %s217, %s218
      %p229 = scmp.eq.s32.totalorder %s24, 0
      %p230 = por %p228, %p229
      %p231 = scmp.ne.s32.totalorder %s217, %s218
      %p232 = scmp.eq.s32.totalorder %s25, 7
      %p233 = por %p231, %p232
      %p235 = scmp.ne.s32.totalorder %s218, %s234
      %p236 = scmp.eq.s32.totalorder %s25, 0
      %p237 = por %p235, %p236
      %p238 = scmp.le.s32.totalorder 1, %s19
      %p239 = scmp.lt.s32.totalorder %s19, 9
      %p240 = pnand %p238, %p239
      %p241 = pneg %p240
      // Predicated region
      $region9: #{tpu_custom_call.1} parent=5 // pred_check
        _
      $region10: #{tpu_custom_call.1} parent=5 // pred_check_branch
        %243 = sbr.rel (%p240) target = $region12
      $region11: #{tpu_custom_call.1} parent=5 // pred_region
        %s244 = ssub.s32 %s19, 1
      $region12: #{tpu_custom_call.1} parent=5 // pred_fallthru
        _
      %p245 = scmp.lt.s32.totalorder %s19, 8
      // Predicated region
      $region13: #{tpu_custom_call.1} parent=5 // pred_check
        %p246 = pneg %p245
      $region14: #{tpu_custom_call.1} parent=5 // pred_check_branch
        %248 = sbr.rel (%p246) target = $region16
      $region15: #{tpu_custom_call.1} parent=5 // pred_region
        // Predicated region
        $region17: #{tpu_custom_call.1} parent=15 // pred_check
          %p249 = pneg %p60
        $region18: #{tpu_custom_call.1} parent=15 // pred_check_branch
          %251 = sbr.rel (%p249) target = $region20
        $region19: #{tpu_custom_call.1} parent=15 // pred_region
          %p252 = scmp.lt.s32.totalorder %s26, 1
          %s253 = scalar_select %p252, %s26, 1
          %p254 = scmp.lt.s32.totalorder %s27, 0
          %s255 = scalar_select %p254, %s27, 0
          %s256 = sadd.s32 %s255, %s253
          %s257 = smul.addr %s256, 8
          %s258 = scalar_lea.vmem %s0, %s257
        $region20: #{tpu_custom_call.1} parent=15 // pred_fallthru
          _
        // Predicated region
        $region21: #{tpu_custom_call.1} parent=15 // pred_check
          %p259 = pneg %p86
        $region22: #{tpu_custom_call.1} parent=15 // pred_check_branch
          %261 = sbr.rel (%p259) target = $region24
        $region23: #{tpu_custom_call.1} parent=15 // pred_region
          %p262 = scmp.lt.s32.totalorder %s26, 1
          %s263 = scalar_select %p262, %s26, 1
          %s264 = smul.addr %s263, 8
          %s265 = scalar_lea.vmem %s1, %s264
        $region24: #{tpu_custom_call.1} parent=15 // pred_fallthru
          _
        // Predicated region
        $region25: #{tpu_custom_call.1} parent=15 // pred_check
          %p266 = pneg %p112
        $region26: #{tpu_custom_call.1} parent=15 // pred_check_branch
          %268 = sbr.rel (%p266) target = $region28
        $region27: #{tpu_custom_call.1} parent=15 // pred_region
          %p269 = scmp.lt.s32.totalorder %s26, 1
          %s270 = scalar_select %p269, %s26, 1
          %s271 = smul.addr %s270, 8
          %s272 = scalar_lea.vmem %s2, %s271
        $region28: #{tpu_custom_call.1} parent=15 // pred_fallthru
          _
        // Predicated region
        $region29: #{tpu_custom_call.1} parent=15 // pred_check
          %p273 = pneg %p138
        $region30: #{tpu_custom_call.1} parent=15 // pred_check_branch
          %275 = sbr.rel (%p273) target = $region32
        $region31: #{tpu_custom_call.1} parent=15 // pred_region
          %s276 = sand.u32 %s128, 1
          %s277 = sand.u32 %s128, 1
          %s278 = smul.addr %s277, 48
          %s279 = scalar_lea.vmem [#allocation2], %s278
          %s280 = smul.addr %s28, 4
          %s281 = smul.addr %s280, 4
          %s282 = scalar_lea.vmem %s3, %s281
          // Predicated region
          $region33: #{tpu_custom_call.1} parent=31 // pred_check
            _
          $region34: #{tpu_custom_call.1} parent=31 // pred_check_branch
            %284 = sbr.rel (0) target = $region36
          $region35: #{tpu_custom_call.1} parent=31 // pred_region
            // Predicated region
            $region37: #{tpu_custom_call.1} parent=35 // pred_check
              _
            $region38: #{tpu_custom_call.1} parent=35 // pred_check_branch
              %286 = sbr.rel target = $region40
            $region39: #{tpu_custom_call.1} parent=35 // pred_region
              // Predicated region
              $region52: #{tpu_custom_call.1} parent=39 // pred_check
                _
              $region53: #{tpu_custom_call.1} parent=39 // pred_check_branch
                %324 = sbr.rel (0) target = $region55
              $region54: #{tpu_custom_call.1} parent=39 // pred_region
                loop: start=0, step=1, limit=1
                $region56: #{tpu_custom_call.1} parent=54 // loop_pre_header
                  _
                $region57: #{tpu_custom_call.1} parent=54 // loop_header
                  %s326 = sphi 0, %s330
                  %p327 = scmp.ge.s32.totalorder %s326, 1
                  %s331 = sphi %s282, %s282
                  %s332 = sphi %s279, %s279
                $region58: #{tpu_custom_call.1} parent=54 // loop_header_branch
                  %329 = sbr.rel (%p327) target = $region62
                $region59: #{tpu_custom_call.1} parent=54 // loop_body
                  _
                $region60: #{tpu_custom_call.1} parent=54 // loop_footer
                  %s330 = sadd.s32 1, %s326
                $region61: #{tpu_custom_call.1} parent=54 // loop_footer_branch
                  %325 = sbr.rel target = $region57
                $region62: #{tpu_custom_call.1} parent=54 // loop_exit
                  _
                %s334 = ssub.s32 16, 1
                loop: start=0, step=1, limit=1
                $region63: #{tpu_custom_call.1} parent=54 // loop_pre_header
                  _
                $region64: #{tpu_custom_call.1} parent=54 // loop_header
                  %s336 = sphi 0, %s340
                  %p337 = scmp.ge.s32.totalorder %s336, 1
                  %s341 = sphi %s282, %s282
                  %s342 = sphi %s279, %s279
                $region65: #{tpu_custom_call.1} parent=54 // loop_header_branch
                  %339 = sbr.rel (%p337) target = $region69
                $region66: #{tpu_custom_call.1} parent=54 // loop_body
                  %v343 = vld [vmem:[%s341] sm:%s334]
                  %344 = vst [vmem:[%s342] sm:%s334] %v343
                  %v345 = vld [vmem:[%s341 + $0x4] sm:%s334]
                  %346 = vst [vmem:[%s342 + $0x4] sm:%s334] %v345
                  %v347 = vld [vmem:[%s341 + $0x8] sm:%s334]
                  %348 = vst [vmem:[%s342 + $0x8] sm:%s334] %v347
                  %v349 = vld [vmem:[%s341 + $0xc] sm:%s334]
                  %350 = vst [vmem:[%s342 + $0xc] sm:%s334] %v349
                  %v351 = vld [vmem:[%s341 + $0x40] sm:%s334]
                  %352 = vst [vmem:[%s342 + $0x10] sm:%s334] %v351
                  %v353 = vld [vmem:[%s341 + $0x44] sm:%s334]
                  %354 = vst [vmem:[%s342 + $0x14] sm:%s334] %v353
                  %v355 = vld [vmem:[%s341 + $0x48] sm:%s334]
                  %356 = vst [vmem:[%s342 + $0x18] sm:%s334] %v355
                  %v357 = vld [vmem:[%s341 + $0x4c] sm:%s334]
                  %358 = vst [vmem:[%s342 + $0x1c] sm:%s334] %v357
                  %v359 = vld [vmem:[%s341 + $0x80] sm:%s334]
                  %360 = vst [vmem:[%s342 + $0x20] sm:%s334] %v359
                  %v361 = vld [vmem:[%s341 + $0x84] sm:%s334]
                  %362 = vst [vmem:[%s342 + $0x24] sm:%s334] %v361
                  %v363 = vld [vmem:[%s341 + $0x88] sm:%s334]
                  %364 = vst [vmem:[%s342 + $0x28] sm:%s334] %v363
                  %v365 = vld [vmem:[%s341 + $0x8c] sm:%s334]
                  %366 = vst [vmem:[%s342 + $0x2c] sm:%s334] %v365
                $region67: #{tpu_custom_call.1} parent=54 // loop_footer
                  %s340 = sadd.s32 1, %s336
                $region68: #{tpu_custom_call.1} parent=54 // loop_footer_branch
                  %335 = sbr.rel target = $region64
                $region69: #{tpu_custom_call.1} parent=54 // loop_exit
                  _
              $region55: #{tpu_custom_call.1} parent=39 // pred_fallthru
                _
            $region40: #{tpu_custom_call.1} parent=35 // pred_fallthru
              _
            // Predicated region
            $region41: #{tpu_custom_call.1} parent=35 // pred_check
              _
            $region42: #{tpu_custom_call.1} parent=35 // pred_check_branch
              %288 = sbr.rel (0) target = $region44
            $region43: #{tpu_custom_call.1} parent=35 // pred_region
              %s290 = ssub.s32 16, 1
              loop: start=0, step=1, limit=1
              $region45: #{tpu_custom_call.1} parent=43 // loop_pre_header
                _
              $region46: #{tpu_custom_call.1} parent=43 // loop_header
                %s292 = sphi 0, %s296
                %p293 = scmp.ge.s32.totalorder %s292, 1
                %s297 = sphi %s282, %s282
                %s298 = sphi %s279, %s279
              $region47: #{tpu_custom_call.1} parent=43 // loop_header_branch
                %295 = sbr.rel (%p293) target = $region51
              $region48: #{tpu_custom_call.1} parent=43 // loop_body
                %v299 = vld [vmem:[%s297] sm:%s290]
                %300 = vst [vmem:[%s298] sm:%s290] %v299
                %v301 = vld [vmem:[%s297 + $0x4] sm:%s290]
                %302 = vst [vmem:[%s298 + $0x4] sm:%s290] %v301
                %v303 = vld [vmem:[%s297 + $0x8] sm:%s290]
                %304 = vst [vmem:[%s298 + $0x8] sm:%s290] %v303
                %v305 = vld [vmem:[%s297 + $0xc] sm:%s290]
                %306 = vst [vmem:[%s298 + $0xc] sm:%s290] %v305
                %v307 = vld [vmem:[%s297 + $0x40] sm:%s290]
                %308 = vst [vmem:[%s298 + $0x10] sm:%s290] %v307
                %v309 = vld [vmem:[%s297 + $0x44] sm:%s290]
                %310 = vst [vmem:[%s298 + $0x14] sm:%s290] %v309
                %v311 = vld [vmem:[%s297 + $0x48] sm:%s290]
                %312 = vst [vmem:[%s298 + $0x18] sm:%s290] %v311
                %v313 = vld [vmem:[%s297 + $0x4c] sm:%s290]
                %314 = vst [vmem:[%s298 + $0x1c] sm:%s290] %v313
                %v315 = vld [vmem:[%s297 + $0x80] sm:%s290]
                %316 = vst [vmem:[%s298 + $0x20] sm:%s290] %v315
                %v317 = vld [vmem:[%s297 + $0x84] sm:%s290]
                %318 = vst [vmem:[%s298 + $0x24] sm:%s290] %v317
                %v319 = vld [vmem:[%s297 + $0x88] sm:%s290]
                %320 = vst [vmem:[%s298 + $0x28] sm:%s290] %v319
                %v321 = vld [vmem:[%s297 + $0x8c] sm:%s290]
                %322 = vst [vmem:[%s298 + $0x2c] sm:%s290] %v321
              $region49: #{tpu_custom_call.1} parent=43 // loop_footer
                %s296 = sadd.s32 1, %s292
              $region50: #{tpu_custom_call.1} parent=43 // loop_footer_branch
                %291 = sbr.rel target = $region46
              $region51: #{tpu_custom_call.1} parent=43 // loop_exit
                _
            $region44: #{tpu_custom_call.1} parent=35 // pred_fallthru
              _
          $region36: #{tpu_custom_call.1} parent=31 // pred_fallthru
            _
          %367 = vnop
        $region32: #{tpu_custom_call.1} parent=15 // pred_fallthru
          _
        // Predicated region
        $region70: #{tpu_custom_call.1} parent=15 // pred_check
          %p368 = pneg %p164
        $region71: #{tpu_custom_call.1} parent=15 // pred_check_branch
          %370 = sbr.rel (%p368) target = $region73
        $region72: #{tpu_custom_call.1} parent=15 // pred_region
          %s371 = sand.u32 %s154, 1
          %s372 = sand.u32 %s154, 1
          %s373 = smul.addr %s372, 3
          %s374 = scalar_lea.vmem [#allocation3], %s373
          %s375 = scalar_lea.vmem %s4, %s28
          // Predicated region
          $region74: #{tpu_custom_call.1} parent=72 // pred_check
            _
          $region75: #{tpu_custom_call.1} parent=72 // pred_check_branch
            %377 = sbr.rel (0) target = $region77
          $region76: #{tpu_custom_call.1} parent=72 // pred_region
            // Predicated region
            $region78: #{tpu_custom_call.1} parent=76 // pred_check
              _
            $region79: #{tpu_custom_call.1} parent=76 // pred_check_branch
              %379 = sbr.rel target = $region81
            $region80: #{tpu_custom_call.1} parent=76 // pred_region
              // Predicated region
              $region93: #{tpu_custom_call.1} parent=80 // pred_check
                _
              $region94: #{tpu_custom_call.1} parent=80 // pred_check_branch
                %399 = sbr.rel (0) target = $region96
              $region95: #{tpu_custom_call.1} parent=80 // pred_region
                %s401 = ssub.s32 2, 1
                loop: start=0, step=1, limit=1
                $region97: #{tpu_custom_call.1} parent=95 // loop_pre_header
                  _
                $region98: #{tpu_custom_call.1} parent=95 // loop_header
                  %s403 = sphi 0, %s407
                  %p404 = scmp.ge.s32.totalorder %s403, 1
                  %s408 = sphi %s375, %s375
                  %s409 = sphi %s374, %s374
                $region99: #{tpu_custom_call.1} parent=95 // loop_header_branch
                  %406 = sbr.rel (%p404) target = $region103
                $region100: #{tpu_custom_call.1} parent=95 // loop_body
                  %v410 = vld [vmem:[%s408] sm:%s401]
                  %411 = vst [vmem:[%s409] sm:%s401] %v410
                  %v412 = vld [vmem:[%s408 + $0x4] sm:%s401]
                  %413 = vst [vmem:[%s409 + $0x1] sm:%s401] %v412
                  %v414 = vld [vmem:[%s408 + $0x8] sm:%s401]
                  %415 = vst [vmem:[%s409 + $0x2] sm:%s401] %v414
                $region101: #{tpu_custom_call.1} parent=95 // loop_footer
                  %s407 = sadd.s32 1, %s403
                $region102: #{tpu_custom_call.1} parent=95 // loop_footer_branch
                  %402 = sbr.rel target = $region98
                $region103: #{tpu_custom_call.1} parent=95 // loop_exit
                  _
              $region96: #{tpu_custom_call.1} parent=80 // pred_fallthru
                _
            $region81: #{tpu_custom_call.1} parent=76 // pred_fallthru
              _
            // Predicated region
            $region82: #{tpu_custom_call.1} parent=76 // pred_check
              _
            $region83: #{tpu_custom_call.1} parent=76 // pred_check_branch
              %381 = sbr.rel (0) target = $region85
            $region84: #{tpu_custom_call.1} parent=76 // pred_region
              %s383 = ssub.s32 2, 1
              loop: start=0, step=1, limit=1
              $region86: #{tpu_custom_call.1} parent=84 // loop_pre_header
                _
              $region87: #{tpu_custom_call.1} parent=84 // loop_header
                %s385 = sphi 0, %s389
                %p386 = scmp.ge.s32.totalorder %s385, 1
                %s390 = sphi %s375, %s375
                %s391 = sphi %s374, %s374
              $region88: #{tpu_custom_call.1} parent=84 // loop_header_branch
                %388 = sbr.rel (%p386) target = $region92
              $region89: #{tpu_custom_call.1} parent=84 // loop_body
                %v392 = vld [vmem:[%s390] sm:%s383]
                %393 = vst [vmem:[%s391] sm:%s383] %v392
                %v394 = vld [vmem:[%s390 + $0x4] sm:%s383]
                %395 = vst [vmem:[%s391 + $0x1] sm:%s383] %v394
                %v396 = vld [vmem:[%s390 + $0x8] sm:%s383]
                %397 = vst [vmem:[%s391 + $0x2] sm:%s383] %v396
              $region90: #{tpu_custom_call.1} parent=84 // loop_footer
                %s389 = sadd.s32 1, %s385
              $region91: #{tpu_custom_call.1} parent=84 // loop_footer_branch
                %384 = sbr.rel target = $region87
              $region92: #{tpu_custom_call.1} parent=84 // loop_exit
                _
            $region85: #{tpu_custom_call.1} parent=76 // pred_fallthru
              _
          $region77: #{tpu_custom_call.1} parent=72 // pred_fallthru
            _
          %416 = vnop
        $region73: #{tpu_custom_call.1} parent=15 // pred_fallthru
          _
      $region16: #{tpu_custom_call.1} parent=5 // pred_fallthru
        _
      %p417 = scmp.le.s32.totalorder 1, %s19
      %p418 = scmp.lt.s32.totalorder %s19, 9
      %p419 = pnand %p417, %p418
      %p420 = pneg %p419
      // Predicated region
      $region104: #{tpu_custom_call.1} parent=5 // pred_check
        _
      $region105: #{tpu_custom_call.1} parent=5 // pred_check_branch
        %422 = sbr.rel (%p419) target = $region107
      $region106: #{tpu_custom_call.1} parent=5 // pred_region
        %s423 = ssub.s32 %s19, 1
        %s424 = sand.u32 %s131, 1
        %s425 = sand.u32 %s131, 1
        %s426 = smul.addr %s425, 48
        %s427 = scalar_lea.vmem [#allocation2], %s426
        // Predicated region
        $region108: #{tpu_custom_call.1} parent=106 // pred_check
          %p428 = pneg %p144
        $region109: #{tpu_custom_call.1} parent=106 // pred_check_branch
          %430 = sbr.rel (%p428) target = $region111
        $region110: #{tpu_custom_call.1} parent=106 // pred_region
          _
        $region111: #{tpu_custom_call.1} parent=106 // pred_fallthru
          _
        %s431 = sand.u32 %s157, 1
        %s432 = sand.u32 %s157, 1
        %s433 = smul.addr %s432, 3
        %s434 = scalar_lea.vmem [#allocation3], %s433
        // Predicated region
        $region112: #{tpu_custom_call.1} parent=106 // pred_check
          %p435 = pneg %p170
        $region113: #{tpu_custom_call.1} parent=106 // pred_check_branch
          %437 = sbr.rel (%p435) target = $region115
        $region114: #{tpu_custom_call.1} parent=106 // pred_region
          _
        $region115: #{tpu_custom_call.1} parent=106 // pred_fallthru
          _
        %p438 = scmp.lt.s32.totalorder %s29, 1
        %s439 = scalar_select %p438, %s29, 1
        %p440 = scmp.lt.s32.totalorder %s30, 0
        %s441 = scalar_select %p440, %s30, 0
        %s442 = sadd.s32 %s441, %s439
        %s443 = smul.addr %s442, 8
        %s444 = scalar_lea.vmem %s0, %s443
        %p445 = pneg %p66
        %p446 = pneg %p63
        %p447 = scmp.lt.s32.totalorder %s29, 1
        %s448 = scalar_select %p447, %s29, 1
        %s449 = smul.addr %s448, 8
        %s450 = scalar_lea.vmem %s1, %s449
        %p451 = pneg %p92
        %p452 = pneg %p89
        %p453 = scmp.lt.s32.totalorder %s29, 1
        %s454 = scalar_select %p453, %s29, 1
        %s455 = smul.addr %s454, 8
        %s456 = scalar_lea.vmem %s2, %s455
        %p457 = pneg %p118
        %p458 = pneg %p115
        %s459 = sand.u32 %s131, 1
        %s460 = sand.u32 %s131, 1
        %s461 = smul.addr %s460, 48
        %s462 = scalar_lea.vmem [#allocation2], %s461
        %p463 = pneg %p144
        %p464 = pneg %p141
        %s465 = sand.u32 %s157, 1
        %s466 = sand.u32 %s157, 1
        %s467 = smul.addr %s466, 3
        %s468 = scalar_lea.vmem [#allocation3], %s467
        %p469 = pneg %p170
        %p470 = pneg %p167
        %p471 = pneg %p200
        %p472 = pneg %p197
        %s473 = sand.u32 %s187, 1
        %s474 = scalar_lea.sflag [#allocation5], %s473
        %s475 = sand.u32 %s187, 1
        %s476 = smul.addr %s475, 8
        %s477 = scalar_lea.vmem [#allocation4], %s476
        %p478 = pneg %p230
        %p479 = pneg %p227
        %s480 = sand.u32 %s217, 1
        %s481 = scalar_lea.sflag [#allocation7], %s480
        %s482 = sand.u32 %s217, 1
        %s483 = smul.addr %s482, 8
        %s484 = scalar_lea.vmem [#allocation6], %s483
        %p485 = scmp.lt.s32.totalorder %s29, 1
        %s486 = scalar_select %p485, %s29, 1
        %p487 = scmp.lt.s32.totalorder %s30, 0
        %s488 = scalar_select %p487, %s30, 0
        %s489 = sadd.s32 %s488, %s486
        %s490 = smul.addr %s489, 8
        %s491 = scalar_lea.vmem %s0, %s490
        %p492 = scmp.lt.s32.totalorder %s29, 1
        %s493 = scalar_select %p492, %s29, 1
        %s494 = smul.addr %s493, 8
        %s495 = scalar_lea.vmem %s1, %s494
        %p496 = scmp.lt.s32.totalorder %s29, 1
        %s497 = scalar_select %p496, %s29, 1
        %s498 = smul.addr %s497, 8
        %s499 = scalar_lea.vmem %s2, %s498
        %v501 = vld [vmem:[%s491] sm:$0xff]
        %v502 = vpack.c.bf16 %v501, %v501
        %v503 = vld [vmem:[%s495] sm:$0xff]
        %v504 = vpack.c.bf16 %v503, %v503
        %v505 = vld [vmem:[%s499] sm:$0xff]
        %v506 = vpack.c.bf16 %v505, %v505
        %v507 = vld [vmem:[%s427] sm:$0xf]
        %v508 = vld [vmem:[%s427 + $0x4] sm:$0xf]
        %v509 = vld [vmem:[%s427 + $0x8] sm:$0xf]
        %v510 = vld [vmem:[%s427 + $0xc] sm:$0xf]
        %v511 = vld [vmem:[%s434] sm:$0x1]
        %v513 = vperm.slane %v511, 0
        %v519 = vunpack.c.l.b16 %v507
        %v520 = vunpack.c.l.b16 %v508
        %v521 = vunpack.c.l.b16 %v509
        %v522 = vunpack.c.l.b16 %v510
        %v523 = vpack.c.b16 %v520, %v519
        %v524 = vpack.c.b16 %v522, %v521
        %vm527 = vcmask 261120
        %v529 = vsel %vm527, %v502, 0
        %531 = vmatpush.bf16.msra.mxu0 0
        %532 = vmatpush.bf16.msra.mxu0 0
        %533 = vmatpush.bf16.msra.mxu0 0
        %534 = vmatpush.bf16.msra.mxu0 0
        %535 = vmatpush.bf16.msra.mxu0 0
        %536 = vmatpush.bf16.msra.mxu0 0
        %537 = vmatpush.bf16.msra.mxu0 %v524
        %538 = vmatpush.bf16.msra.mxu0 %v523
        %539 = vmatmul.bf16.gmra.mxu0 %v529
        %v540 = vpop.f32.mrf.mxu0
        %v541 = vadd.f32 %v513, %v540
        %v542 = vpop.f32.mrf.mxu0
        %543 = vdwg.mxu0
        %s544 = scalar_lea.vmem %s427, 16 [#allocation2]
        %v545 = vld [vmem:[%s544] sm:$0xf]
        %v546 = vld [vmem:[%s544 + $0x4] sm:$0xf]
        %v547 = vld [vmem:[%s544 + $0x8] sm:$0xf]
        %v548 = vld [vmem:[%s544 + $0xc] sm:$0xf]
        %s549 = scalar_lea.vmem %s434, 1 [#allocation3]
        %v550 = vld [vmem:[%s549] sm:$0x1]
        %v552 = vperm.slane %v550, 0
        %v558 = vunpack.c.l.b16 %v545
        %v559 = vunpack.c.l.b16 %v546
        %v560 = vunpack.c.l.b16 %v547
        %v561 = vunpack.c.l.b16 %v548
        %v562 = vpack.c.b16 %v559, %v558
        %v563 = vpack.c.b16 %v561, %v560
        %v567 = vsel %vm527, %v504, 0
        %569 = vmatpush.bf16.msra.mxu0 0
        %570 = vmatpush.bf16.msra.mxu0 0
        %571 = vmatpush.bf16.msra.mxu0 0
        %572 = vmatpush.bf16.msra.mxu0 0
        %573 = vmatpush.bf16.msra.mxu0 0
        %574 = vmatpush.bf16.msra.mxu0 0
        %575 = vmatpush.bf16.msra.mxu0 %v563
        %576 = vmatpush.bf16.msra.mxu0 %v562
        %577 = vmatmul.bf16.gmra.mxu0 %v567
        %v578 = vpop.f32.mrf.mxu0
        %v579 = vadd.f32 %v552, %v578
        %v580 = vpop.f32.mrf.mxu0
        %581 = vdwg.mxu0
        %s582 = scalar_lea.vmem %s427, 32 [#allocation2]
        %v583 = vld [vmem:[%s582] sm:$0xf]
        %v584 = vld [vmem:[%s582 + $0x4] sm:$0xf]
        %v585 = vld [vmem:[%s582 + $0x8] sm:$0xf]
        %v586 = vld [vmem:[%s582 + $0xc] sm:$0xf]
        %s587 = scalar_lea.vmem %s434, 2 [#allocation3]
        %v588 = vld [vmem:[%s587] sm:$0x1]
        %v590 = vperm.slane %v588, 0
        %v596 = vunpack.c.l.b16 %v583
        %v597 = vunpack.c.l.b16 %v584
        %v598 = vunpack.c.l.b16 %v585
        %v599 = vunpack.c.l.b16 %v586
        %v600 = vpack.c.b16 %v597, %v596
        %v601 = vpack.c.b16 %v599, %v598
        %v605 = vsel %vm527, %v506, 0
        %607 = vmatpush.bf16.msra.mxu0 0
        %608 = vmatpush.bf16.msra.mxu0 0
        %609 = vmatpush.bf16.msra.mxu0 0
        %610 = vmatpush.bf16.msra.mxu0 0
        %611 = vmatpush.bf16.msra.mxu0 0
        %612 = vmatpush.bf16.msra.mxu0 0
        %613 = vmatpush.bf16.msra.mxu0 %v601
        %614 = vmatpush.bf16.msra.mxu0 %v600
        %615 = vmatmul.bf16.gmra.mxu0 %v605
        %v616 = vpop.f32.mrf.mxu0
        %v617 = vadd.f32 %v590, %v616
        %v618 = vpop.f32.mrf.mxu0
        %619 = vdwg.mxu0
        %v620 = vpack.c.bf16 %v541, %v541
        %v621 = vpack.c.bf16 %v579, %v579
        %vm622 = vcmask 64512
        %v624 = vsel %vm622, %v620, 0
        %v627 = vsel %vm622, %v621, 0
        %629 = vmatpush.bf16.xpose.msra.mxu0 0
        %630 = vmatpush.bf16.xpose.msra.mxu0 0
        %631 = vmatpush.bf16.xpose.msra.mxu0 0
        %632 = vmatpush.bf16.xpose.msra.mxu0 0
        %633 = vmatpush.bf16.xpose.msra.mxu0 0
        %634 = vmatpush.bf16.xpose.msra.mxu0 0
        %635 = vmatpush.bf16.xpose.msra.mxu0 0
        %636 = vmatpush.bf16.xpose.msra.mxu0 %v627
        %637 = vmatmul.bf16.gmra.mxu0 %v624
        %v638 = vpop.f32.mrf.mxu0
        %v639 = vadd.f32 0.0, %v638
        %v640 = vpop.f32.mrf.mxu0
        %641 = vdwg.mxu0
        %v642 = vsel %vm622, %v639, -inf
        %643 = vmax.xlane.f32.xlu0 %v642
        %v644 = vpop.xlane.xlu0 %643
        %v645 = vsub.f32 %v639, %v644
        %v646 = vmul.f32 %v645, 1.442695
        %v647 = vpow.pop %v646
        %v648 = vsel %vm622, %v647, 0.0
        %649 = vadd.xlane.f32.xlu0 %v648
        %v650 = vpop.xlane.xlu0 %649
        %v651 = vrcp.pop %v650
        %v652 = vmul.f32 %v650, %v651
        %v653 = vsub.f32 1.0, %v652
        %v654 = vmul.f32 %v651, %v653
        %v655 = vadd.f32 %v651, %v654
        %vm656 = vweird.f32 %v650
        %vm657 = vweird.f32 %v651
        %vm658 = vmor %vm656, %vm657
        %v659 = vsel %vm658, %v651, %v655
        %v660 = vand.u32 2147483647, %v650
        %vm661 = vcmp.eq.f32.partialorder %v660, 8.507059e+37
        %v662 = vand.u32 %v650, 2147483648
        %v663 = vor.u32 1.1754944e-38, %v662
        %v664 = vsel %vm661, %v663, %v659
        %v665 = vmul.f32 %v647, %v664
        %666 = vst.msk [vmem:[%s484] sm:$0xff] %vm622, %v665
        %v667 = vpack.c.bf16 %v665, %v665
        %v668 = vpack.c.bf16 %v617, %v617
        %v670 = vsel %vm622, %v667, 0
        %vm672 = vcmask 1043456
        %v674 = vsel %vm672, %v668, 0
        %676 = vmatpush.bf16.msra.mxu0 0
        %677 = vmatpush.bf16.msra.mxu0 0
        %678 = vmatpush.bf16.msra.mxu0 0
        %679 = vmatpush.bf16.msra.mxu0 0
        %680 = vmatpush.bf16.msra.mxu0 0
        %681 = vmatpush.bf16.msra.mxu0 0
        %682 = vmatpush.bf16.msra.mxu0 0
        %683 = vmatpush.bf16.msra.mxu0 %v674
        %684 = vmatmul.bf16.gmra.mxu0 %v670
        %v685 = vpop.f32.mrf.mxu0
        %v686 = vadd.f32 0.0, %v685
        %v687 = vpop.f32.mrf.mxu0
        %688 = vdwg.mxu0
        %689 = vst.msk [vmem:[%s477] sm:$0xff] %vm622, %v686
        %s690 = sand.u32 %s187, 1
        %s691 = scalar_lea.sflag [#allocation5], %s690
        %s692 = sand.u32 %s187, 1
        %s693 = smul.addr %s692, 8
        %s694 = scalar_lea.vmem [#allocation4], %s693
        %s695 = sand.u32 %s217, 1
        %s696 = scalar_lea.sflag [#allocation7], %s695
        %s697 = sand.u32 %s217, 1
        %s698 = smul.addr %s697, 8
        %s699 = scalar_lea.vmem [#allocation6], %s698
        // Predicated region
        $region116: #{tpu_custom_call.1} parent=106 // pred_check
          %p700 = pneg %p197
        $region117: #{tpu_custom_call.1} parent=106 // pred_check_branch
          %702 = sbr.rel (%p700) target = $region119
        $region118: #{tpu_custom_call.1} parent=106 // pred_region
          %704 = vsyncadd %s691, 0
          %s705 = sadd.s32 %s30, %s31
          %s706 = smul.addr %s29, 4
          %s707 = sadd.s32 %s705, %s706
          %s708 = smul.addr %s707, 8
          %s709 = scalar_lea.hbm %s5, %s708
          %s711 = sshll.u32 %s694, 4
          %s712 = int_to_ptr.vmem [resolvable:$true] %s711
          %s713 = sshll.u32 %s709, 4
          %s714 = int_to_ptr.hbm [resolvable:$true] %s713
          %716 = dma.vmem_to_hbm [thread:$0]  %s712, 128, %s714, %s691
        $region119: #{tpu_custom_call.1} parent=106 // pred_fallthru
          _
        // Predicated region
        $region120: #{tpu_custom_call.1} parent=106 // pred_check
          %p717 = pneg %p227
        $region121: #{tpu_custom_call.1} parent=106 // pred_check_branch
          %719 = sbr.rel (%p717) target = $region123
        $region122: #{tpu_custom_call.1} parent=106 // pred_region
          %721 = vsyncadd %s696, 0
          %s722 = sadd.s32 %s30, %s29
          %s723 = smul.addr %s31, 2
          %s724 = sadd.s32 %s722, %s723
          %s725 = smul.addr %s724, 8
          %s726 = scalar_lea.hbm %s6, %s725
          %s728 = sshll.u32 %s699, 4
          %s729 = int_to_ptr.vmem [resolvable:$true] %s728
          %s730 = sshll.u32 %s726, 4
          %s731 = int_to_ptr.hbm [resolvable:$true] %s730
          %733 = dma.vmem_to_hbm [thread:$0]  %s729, 128, %s731, %s696
        $region123: #{tpu_custom_call.1} parent=106 // pred_fallthru
          _
      $region107: #{tpu_custom_call.1} parent=5 // pred_fallthru
        _
      %p734 = scmp.le.s32.totalorder 2, %s19
      // Predicated region
      $region124: #{tpu_custom_call.1} parent=5 // pred_check
        %p735 = pneg %p734
      $region125: #{tpu_custom_call.1} parent=5 // pred_check_branch
        %737 = sbr.rel (%p735) target = $region127
      $region126: #{tpu_custom_call.1} parent=5 // pred_region
        %s738 = ssub.s32 %s19, 2
        // Predicated region
        $region128: #{tpu_custom_call.1} parent=126 // pred_check
          %p739 = pneg %p203
        $region129: #{tpu_custom_call.1} parent=126 // pred_check_branch
          %741 = sbr.rel (%p739) target = $region131
        $region130: #{tpu_custom_call.1} parent=126 // pred_region
          %s742 = sand.u32 %s188, 1
          %s743 = scalar_lea.sflag [#allocation5], %s742
          %s744 = sand.u32 %s188, 1
          %s745 = smul.addr %s744, 8
          %s746 = scalar_lea.vmem [#allocation4], %s745
          %748 = dma.done %s743, 128
        $region131: #{tpu_custom_call.1} parent=126 // pred_fallthru
          _
        // Predicated region
        $region132: #{tpu_custom_call.1} parent=126 // pred_check
          %p749 = pneg %p233
        $region133: #{tpu_custom_call.1} parent=126 // pred_check_branch
          %751 = sbr.rel (%p749) target = $region135
        $region134: #{tpu_custom_call.1} parent=126 // pred_region
          %s752 = sand.u32 %s218, 1
          %s753 = scalar_lea.sflag [#allocation7], %s752
          %s754 = sand.u32 %s218, 1
          %s755 = smul.addr %s754, 8
          %s756 = scalar_lea.vmem [#allocation6], %s755
          %758 = dma.done %s753, 128
        $region135: #{tpu_custom_call.1} parent=126 // pred_fallthru
          _
      $region127: #{tpu_custom_call.1} parent=5 // pred_fallthru
        _
    $region6: #{tpu_custom_call.1} parent=1 // loop_footer
      %s23 = sadd.s32 1, %s19
    $region7: #{tpu_custom_call.1} parent=1 // loop_footer_branch
      %18 = sbr.rel target = $region3
    $region8: #{tpu_custom_call.1} parent=1 // loop_exit
      _
    %759 = vsyncpa [#allocation5], 1
    %s760 = scalar_lea.sflag [#allocation5], 1
    %761 = vsyncpa %s760, 1
    %762 = vsyncpa [#allocation7], 1
    %s763 = scalar_lea.sflag [#allocation7], 1
    %764 = vsyncpa %s763, 1

</llo_original>
